<compile_context>
chip_gen: v7x
topology: tpu7x:2x2x1
jax: 0.10.0
libtpu: 0.0.40
codegen_flags: <defaults>
</compile_context>

<pallas_src>
import math

import jax
import jax.numpy as jnp
from jax.experimental import pallas as pl
from jax.experimental.pallas import tpu as pltpu

# ---------------- model dims (consistent with the module) --------------------
M = 32            # latent dim
H = 64            # hidden dim of the decoder MLP
D_OUT = 28 * 28   # 784, unflattened to (28, 28) in the wrapper


def _round_up(x, m):
    return ((x + m - 1) // m) * m


def _num_tensorcores():
    """Best-effort TensorCore-per-chip query (v5e/v6e: 1, v7x: 2)."""
    try:
        info = pltpu.get_tpu_info()
        for name in ("num_cores", "core_count", "num_tensorcores",
                     "tensorcore_count", "cores_per_chip"):
            v = getattr(info, name, None)
            if isinstance(v, int) and v > 0:
                return v
    except Exception:
        pass
    try:
        kind = jax.devices()[0].device_kind.lower()
        if "v7" in kind:
            return 2
    except Exception:
        pass
    return 1  # conservative default: never split a full-batch tile


def _select_batch_tiling(B, tb_cap, n_cores):
    """Balanced batch tiles: minimize zero-padded rows; even tile count on 2 TCs."""
    tb_cap = max(8, (tb_cap // 8) * 8)
    n_tiles = pl.cdiv(B, tb_cap)
    if n_cores > 1 and B >= 8 * n_cores:
        n_tiles = _round_up(n_tiles, n_cores)
    tb = _round_up(pl.cdiv(B, n_tiles), 8)
    return tb, n_tiles, tb * n_tiles  # (tile, grid, padded batch)


# ------------------------------ Pallas kernel --------------------------------
def bernoulli_decoder_kernel(z_ref, w1_ref, b1_ref, w2_ref, b2_ref,
                             w3_ref, b3_ref, logits_ref, probs_ref=None):
    # Matmul operand dtype follows the weights (bf16 when bf16_matmul=True);
    # accumulation is always f32 on the MXU.
    cd = w1_ref.dtype

    # hidden layer 1: (tb, M) @ (M, H) + b1, ReLU
    h = jnp.dot(z_ref[...].astype(cd), w1_ref[...],
                preferred_element_type=jnp.float32)
    h = jnp.maximum(h + b1_ref[...], 0.0)
    # hidden layer 2: (tb, H) @ (H, H) + b2, ReLU
    h = jnp.dot(h.astype(cd), w2_ref[...], preferred_element_type=jnp.float32)
    h = jnp.maximum(h + b2_ref[...], 0.0)
    # output layer: (tb, H) @ (H, 784) + b3 -> Bernoulli logits (f32)
    logits = jnp.dot(h.astype(cd), w3_ref[...],
                     preferred_element_type=jnp.float32) + b3_ref[...]
    logits_ref[...] = logits

    if probs_ref is not None:
        # sigmoid via exp + approx reciprocal: both on the EUP slot.
        e = jnp.exp(-logits)
        probs = pl.reciprocal(1.0 + e, approx=True)
        probs_ref[...] = probs.astype(probs_ref.dtype)


# ------------------------------ wrapper ---------------------------------------
def bernoulli_decoder_forward(z, params, *, tb=1024, probs_dtype=jnp.bfloat16,
                              return_probs=True, bf16_matmul=True):
    """Returns (logits_f32, probs) of shape (B, 28, 28); probs is None if not requested."""
    w1, b1, w2, b2, w3, b3 = params
    B, M_in = z.shape
    D_out = w3.shape[1]

    if bf16_matmul:
        # Weights cast once per call (halves weight DMA bytes too); biases stay
        # f32 since they are added to the f32 accumulator.
        w1, w2, w3 = (w.astype(jnp.bfloat16) for w in (w1, w2, w3))

    # --- batch tiling: balanced tiles, generation-aware core split ------------
    tb_eff, n_tiles, B_pad = _select_batch_tiling(B, tb, _num_tensorcores())
    z_p = jnp.pad(z, ((0, B_pad - B), (0, 0))) if B_pad != B else z

    # Weights/biases: same full block at every grid step -> VMEM-resident.
    full = lambda arr: pl.BlockSpec(arr.shape, lambda i: (0,) * arr.ndim)
    row_tile = lambda d: pl.BlockSpec((tb_eff, d), lambda i: (i, 0))

    out_shapes = [jax.ShapeDtypeStruct((B_pad, D_out), jnp.float32)]
    out_specs = [row_tile(D_out)]
    if return_probs:
        out_shapes.append(jax.ShapeDtypeStruct((B_pad, D_out), probs_dtype))
        out_specs.append(row_tile(D_out))

    outs = pl.pallas_call(
        bernoulli_decoder_kernel,
        out_shape=tuple(out_shapes),
        grid_spec=pl.GridSpec(
            grid=(n_tiles,),
            in_specs=[
                row_tile(M_in),            # z batch tile
                full(w1), full(b1),        # layer 1
                full(w2), full(b2),        # layer 2
                full(w3), full(b3),        # layer 3
            ],
            out_specs=out_specs,
        ),
        compiler_params=pltpu.CompilerParams(
            dimension_semantics=("parallel",)),
    )(z_p, w1, b1, w2, b2, w3, b3)

    if return_probs:
        logits_flat, probs_flat = outs
    else:
        (logits_flat,) = outs
        probs_flat = None

    # (B_pad, 784) -> (B, 28, 28): batch slice (no-op when B_pad == B) plus a
    # pure metadata reshape -- no lane slicing, no extra HBM copy.
    logits = logits_flat[:B].reshape(B, 28, 28)
    probs = probs_flat[:B].reshape(B, 28, 28) if return_probs else None
    return logits, probs


# --------------------------- parameter construction --------------------------
def init_params(key):
    """Deterministic init mimicking torch.nn.Linear (U(-1/sqrt(fan_in), +))."""
    ks = jax.random.split(key, 6)

    def linear(kw, kb, fan_in, fan_out):
        bound = 1.0 / math.sqrt(fan_in)
        w = jax.random.uniform(kw, (fan_in, fan_out), jnp.float32, -bound, bound)
        b = jax.random.uniform(kb, (1, fan_out), jnp.float32, -bound, bound)
        return w, b

    w1, b1 = linear(ks[0], ks[1], M, H)
    w2, b2 = linear(ks[2], ks[3], H, H)
    w3, b3 = linear(ks[4], ks[5], H, D_OUT)
    return (w1, b1, w2, b2, w3, b3)


def reference_forward(z, params):
    w1, b1, w2, b2, w3, b3 = params
    h = jnp.maximum(z @ w1 + b1, 0.0)
    h = jnp.maximum(h @ w2 + b2, 0.0)
    logits = (h @ w3 + b3).reshape(z.shape[0], 28, 28)
    return logits, jax.nn.sigmoid(logits)


# ----------------------------------- main ------------------------------------
if __name__ == "__main__":
    key = jax.random.PRNGKey(0)
    kz, kp = jax.random.split(key)

    B = 16
    z = jax.random.normal(kz, (B, M), dtype=jnp.float32)
    params = init_params(kp)

    # nn.Parameter(torch.ones(28, 28) * 0.5): present in the module but unused
    # in forward() (BernoulliDecoder ignores self.std).
    std = jnp.ones((28, 28), jnp.float32) * 0.5  # noqa: F841

    ref_logits, ref_probs = reference_forward(z, params)

    # Default path: bf16 matmul operands, bf16 probs (writeback-optimized).
    logits, probs = bernoulli_decoder_forward(z, params)
    jax.block_until_ready((logits, probs))
    assert logits.shape == (B, 28, 28) and probs.shape == (B, 28, 28)
    assert logits.dtype == jnp.float32
    assert jnp.allclose(logits, ref_logits, atol=5e-2, rtol=5e-2)
    assert jnp.allclose(probs.astype(jnp.float32), ref_probs, atol=2e-2)

    # f32 matmuls, probs skipped entirely (BCE-with-logits training loop).
    logits_f32, probs_none = bernoulli_decoder_forward(
        z, params, bf16_matmul=False, return_probs=False)
    jax.block_until_ready(logits_f32)
    assert probs_none is None
    assert jnp.allclose(logits_f32, ref_logits, atol=1e-4, rtol=1e-4)

    # f32 matmuls with f32 probs (approx-reciprocal sigmoid on the EUP).
    _, probs_f32 = bernoulli_decoder_forward(
        z, params, bf16_matmul=False, probs_dtype=jnp.float32)
    jax.block_until_ready(probs_f32)
    assert jnp.allclose(probs_f32, ref_probs, atol=5e-3)

    # TODO(synk): the td.Independent(td.Bernoulli(...), 2) *object* itself has no
    # tensor equivalent; the kernel returns its parameterization (logits, probs).
    print("KERNEL_OK")
</pallas_src>

<mosaic_0001>
module attributes {stable_mosaic.version = 11 : i64} {
  func.func @bernoulli_decoder_kernel(%arg0: i32, %arg1: memref<16x32xf32, #tpu.memory_space<vmem>>, %arg2: memref<32x64xbf16, #tpu.memory_space<vmem>>, %arg3: memref<1x64xf32, #tpu.memory_space<vmem>>, %arg4: memref<64x64xbf16, #tpu.memory_space<vmem>>, %arg5: memref<1x64xf32, #tpu.memory_space<vmem>>, %arg6: memref<64x784xbf16, #tpu.memory_space<vmem>>, %arg7: memref<1x784xf32, #tpu.memory_space<vmem>>, %arg8: memref<16x784xf32, #tpu.memory_space<vmem>>, %arg9: memref<16x784xbf16, #tpu.memory_space<vmem>>) attributes {dimension_semantics = [#tpu.dimension_semantics<parallel>], iteration_bounds = array<i64: 1>, scalar_prefetch = 0 : i64, scratch_operands = 0 : i64, tpu.core_type = #tpu.core_type<tc>, window_params = [{transform_indices = @transform_0, window_bounds = array<i64: 16, 32>}, {pipeline_mode = #tpu.pipeline_mode<synchronous>, transform_indices = @transform_1, window_bounds = array<i64: 32, 64>}, {pipeline_mode = #tpu.pipeline_mode<synchronous>, transform_indices = @transform_2, window_bounds = array<i64: 1, 64>}, {pipeline_mode = #tpu.pipeline_mode<synchronous>, transform_indices = @transform_3, window_bounds = array<i64: 64, 64>}, {pipeline_mode = #tpu.pipeline_mode<synchronous>, transform_indices = @transform_4, window_bounds = array<i64: 1, 64>}, {pipeline_mode = #tpu.pipeline_mode<synchronous>, transform_indices = @transform_5, window_bounds = array<i64: 64, 784>}, {pipeline_mode = #tpu.pipeline_mode<synchronous>, transform_indices = @transform_6, window_bounds = array<i64: 1, 784>}, {transform_indices = @transform_7, window_bounds = array<i64: 16, 784>}, {transform_indices = @transform_8, window_bounds = array<i64: 16, 784>}]} {
    %c0 = arith.constant 0 : index
    %c0_0 = arith.constant 0 : index
    %0 = vector.load %arg1[%c0, %c0_0] : memref<16x32xf32, #tpu.memory_space<vmem>>, vector<16x32xf32>
    %1 = arith.truncf %0 : vector<16x32xf32> to vector<16x32xbf16>
    %c0_1 = arith.constant 0 : index
    %c0_2 = arith.constant 0 : index
    %2 = vector.load %arg2[%c0_1, %c0_2] : memref<32x64xbf16, #tpu.memory_space<vmem>>, vector<32x64xbf16>
    %cst = arith.constant dense<0.000000e+00> : vector<16x64xf32>
    %3 = tpu.matmul %1, %2, %cst {dimension_numbers = #tpu.dot_dimension_numbers<[1], [0], [0], [1], [0, 0, 1, 1], [], []>} : vector<16x32xbf16>, vector<32x64xbf16>, vector<16x64xf32> -> vector<16x64xf32>
    %c0_3 = arith.constant 0 : index
    %c0_4 = arith.constant 0 : index
    %4 = vector.load %arg3[%c0_3, %c0_4] : memref<1x64xf32, #tpu.memory_space<vmem>>, vector<1x64xf32>
    %5 = vector.broadcast %4 : vector<1x64xf32> to vector<16x64xf32>
    %6 = arith.addf %3, %5 : vector<16x64xf32>
    %cst_5 = arith.constant 0.000000e+00 : f32
    %7 = vector.broadcast %cst_5 : f32 to vector<16x64xf32>
    %8 = arith.maximumf %6, %7 : vector<16x64xf32>
    %9 = arith.truncf %8 : vector<16x64xf32> to vector<16x64xbf16>
    %c0_6 = arith.constant 0 : index
    %c0_7 = arith.constant 0 : index
    %10 = vector.load %arg4[%c0_6, %c0_7] : memref<64x64xbf16, #tpu.memory_space<vmem>>, vector<64x64xbf16>
    %cst_8 = arith.constant dense<0.000000e+00> : vector<16x64xf32>
    %11 = tpu.matmul %9, %10, %cst_8 {dimension_numbers = #tpu.dot_dimension_numbers<[1], [0], [0], [1], [0, 0, 1, 1], [], []>} : vector<16x64xbf16>, vector<64x64xbf16>, vector<16x64xf32> -> vector<16x64xf32>
    %c0_9 = arith.constant 0 : index
    %c0_10 = arith.constant 0 : index
    %12 = vector.load %arg5[%c0_9, %c0_10] : memref<1x64xf32, #tpu.memory_space<vmem>>, vector<1x64xf32>
    %13 = vector.broadcast %12 : vector<1x64xf32> to vector<16x64xf32>
    %14 = arith.addf %11, %13 : vector<16x64xf32>
    %cst_11 = arith.constant 0.000000e+00 : f32
    %15 = vector.broadcast %cst_11 : f32 to vector<16x64xf32>
    %16 = arith.maximumf %14, %15 : vector<16x64xf32>
    %17 = arith.truncf %16 : vector<16x64xf32> to vector<16x64xbf16>
    %c0_12 = arith.constant 0 : index
    %c0_13 = arith.constant 0 : index
    %18 = vector.load %arg6[%c0_12, %c0_13] : memref<64x784xbf16, #tpu.memory_space<vmem>>, vector<64x784xbf16>
    %cst_14 = arith.constant dense<0.000000e+00> : vector<16x784xf32>
    %19 = tpu.matmul %17, %18, %cst_14 {dimension_numbers = #tpu.dot_dimension_numbers<[1], [0], [0], [1], [0, 0, 1, 1], [], []>} : vector<16x64xbf16>, vector<64x784xbf16>, vector<16x784xf32> -> vector<16x784xf32>
    %c0_15 = arith.constant 0 : index
    %c0_16 = arith.constant 0 : index
    %20 = vector.load %arg7[%c0_15, %c0_16] : memref<1x784xf32, #tpu.memory_space<vmem>>, vector<1x784xf32>
    %21 = vector.broadcast %20 : vector<1x784xf32> to vector<16x784xf32>
    %22 = arith.addf %19, %21 : vector<16x784xf32>
    %c0_17 = arith.constant 0 : index
    %c0_18 = arith.constant 0 : index
    %23 = vector.load %arg8[%c0_17, %c0_18] : memref<16x784xf32, #tpu.memory_space<vmem>>, vector<16x784xf32>
    tpu.vector_store %arg8[%c0_17, %c0_18], %22 {strides = array<i32>} : memref<16x784xf32, #tpu.memory_space<vmem>>, vector<16x784xf32>,
    %cst_19 = arith.constant 0.000000e+00 : f32
    %24 = vector.broadcast %cst_19 : f32 to vector<16x784xf32>
    %25 = arith.subf %24, %22 : vector<16x784xf32>
    %26 = math.exp %25 : vector<16x784xf32>
    %cst_20 = arith.constant 1.000000e+00 : f32
    %27 = vector.broadcast %cst_20 : f32 to vector<16x784xf32>
    %28 = arith.addf %27, %26 : vector<16x784xf32>
    %29 = tpu.reciprocal %28 {approx = true} : vector<16x784xf32> -> vector<16x784xf32>
    %30 = arith.truncf %29 : vector<16x784xf32> to vector<16x784xbf16>
    %c0_21 = arith.constant 0 : index
    %c0_22 = arith.constant 0 : index
    %31 = vector.load %arg9[%c0_21, %c0_22] : memref<16x784xbf16, #tpu.memory_space<vmem>>, vector<16x784xbf16>
    tpu.vector_store %arg9[%c0_21, %c0_22], %30 {strides = array<i32>} : memref<16x784xbf16, #tpu.memory_space<vmem>>, vector<16x784xbf16>,
    return
  }
  func.func @transform_0(%arg0: i32) -> (i32, i32) {
    %c0_i32 = arith.constant 0 : i32
    %c0_i32_0 = arith.constant 0 : i32
    return %arg0, %c0_i32 : i32, i32
  }
  func.func @transform_1(%arg0: i32) -> (i32, i32) {
    %c0_i32 = arith.constant 0 : i32
    %c0_i32_0 = arith.constant 0 : i32
    %c0_i32_1 = arith.constant 0 : i32
    return %c0_i32, %c0_i32_0 : i32, i32
  }
  func.func @transform_2(%arg0: i32) -> (i32, i32) {
    %c0_i32 = arith.constant 0 : i32
    %c0_i32_0 = arith.constant 0 : i32
    %c0_i32_1 = arith.constant 0 : i32
    return %c0_i32, %c0_i32_0 : i32, i32
  }
  func.func @transform_3(%arg0: i32) -> (i32, i32) {
    %c0_i32 = arith.constant 0 : i32
    %c0_i32_0 = arith.constant 0 : i32
    %c0_i32_1 = arith.constant 0 : i32
    return %c0_i32, %c0_i32_0 : i32, i32
  }
  func.func @transform_4(%arg0: i32) -> (i32, i32) {
    %c0_i32 = arith.constant 0 : i32
    %c0_i32_0 = arith.constant 0 : i32
    %c0_i32_1 = arith.constant 0 : i32
    return %c0_i32, %c0_i32_0 : i32, i32
  }
  func.func @transform_5(%arg0: i32) -> (i32, i32) {
    %c0_i32 = arith.constant 0 : i32
    %c0_i32_0 = arith.constant 0 : i32
    %c0_i32_1 = arith.constant 0 : i32
    return %c0_i32, %c0_i32_0 : i32, i32
  }
  func.func @transform_6(%arg0: i32) -> (i32, i32) {
    %c0_i32 = arith.constant 0 : i32
    %c0_i32_0 = arith.constant 0 : i32
    %c0_i32_1 = arith.constant 0 : i32
    return %c0_i32, %c0_i32_0 : i32, i32
  }
  func.func @transform_7(%arg0: i32) -> (i32, i32) {
    %c0_i32 = arith.constant 0 : i32
    %c0_i32_0 = arith.constant 0 : i32
    return %arg0, %c0_i32 : i32, i32
  }
  func.func @transform_8(%arg0: i32) -> (i32, i32) {
    %c0_i32 = arith.constant 0 : i32
    %c0_i32_0 = arith.constant 0 : i32
    return %arg0, %c0_i32 : i32, i32
  }
}

</mosaic_0001>

<llo_original>
// kernel: tpu_custom_call.1
$region0: #{tpu_custom_call.1}
  #allocation0 [shape = 'u32[]', space=smem, size = 0x4, offset = 0x4, fixed_abs, tag = 'smem constant byte address 0x4 - core index']
  #allocation1 [shape = 'u32[144,128]{1,0:T(1,128)}', space=vmem, size = 0x12000, scoped, tag = 'internal scratch']
  %s0 = inlined_call_operand.hbm [shape: f32[16,32], index: 0, kind: input, shape index: {}]
  %s1 = inlined_call_operand.hbm [shape: bf16[32,64], index: 1, kind: input, shape index: {}]
  %s2 = inlined_call_operand.vmem [shape: f32[1,64], index: 2, kind: input, shape index: {}]
  %s3 = inlined_call_operand.hbm [shape: bf16[64,64], index: 3, kind: input, shape index: {}]
  %s4 = inlined_call_operand.vmem [shape: f32[1,64], index: 4, kind: input, shape index: {}]
  %s5 = inlined_call_operand.hbm [shape: bf16[64,784], index: 5, kind: input, shape index: {}]
  %s6 = inlined_call_operand.vmem [shape: f32[1,784], index: 6, kind: input, shape index: {}]
  %s7 = inlined_call_operand.hbm [shape: f32[16,784], index: 7, kind: output, shape index: {0}]
  %s8 = inlined_call_operand.hbm [shape: bf16[16,784], index: 8, kind: output, shape index: {1}]
  %9 = xla_tuple %s7, %s8
  %s10 = sld [smem:[#allocation0]]
  $region62: #{tpu_custom_call.1} parent=0
    _
  %s12 = ssub.s32 1, %s10
  %s13 = scalar_select 0, %s12, %s10
  $region1: #{tpu_custom_call.1} parent=0
    #allocation2 [shape = 'u8[8192]{0}', space=vmem, size = 0x2000, scoped, tag = 'input window, operand 0, single buffered']
    #allocation3 [shape = 's32[1]{0}', space=sflag, size = 0x4, scoped, tag = 'scoped memory for tpu_custom_call.1']
    #allocation4 [shape = 's32[1]{0}', space=sflag, size = 0x4, scoped, tag = 'scoped memory for tpu_custom_call.1']
    #allocation5 [shape = 'u8[8192]{0}', space=vmem, size = 0x2000, scoped, tag = 'input window, operand 1, single buffered']
    #allocation6 [shape = 's32[1]{0}', space=sflag, size = 0x4, scoped, tag = 'scoped memory for tpu_custom_call.1']
    #allocation7 [shape = 'u8[16384]{0}', space=vmem, size = 0x4000, scoped, tag = 'input window, operand 3, single buffered']
    #allocation8 [shape = 'u8[114688]{0}', space=vmem, size = 0x1c000, scoped, tag = 'input window, operand 5, single buffered']
    #allocation9 [shape = 's32[1]{0}', space=sflag, size = 0x4, scoped, tag = 'scoped memory for tpu_custom_call.1']
    #allocation10 [shape = 'u8[57344]{0}', space=vmem, size = 0xe000, scoped, tag = 'output window, operand 0, single buffered']
    #allocation11 [shape = 'u8[28672]{0}', space=vmem, size = 0x7000, scoped, tag = 'output window, operand 1, single buffered']
    #allocation12 [shape = 's32[1]{0}', space=sflag, size = 0x4, scoped, tag = 'scoped memory for tpu_custom_call.1']
    %14 = vsyncpa [#allocation3], 0
    %15 = vsyncpa [#allocation6], 0
    %16 = vsyncpa [#allocation9], 0
    %17 = vsyncpa [#allocation4], 0
    %18 = vsyncpa [#allocation12], 0
    // Predicated region
    $region2: #{tpu_custom_call.1} parent=1 // pred_check
      _
    $region3: #{tpu_custom_call.1} parent=1 // pred_check_branch
      %20 = sbr.rel (0) target = $region5
    $region4: #{tpu_custom_call.1} parent=1 // pred_region
      %s22 = ssub.s32 256, 256
      %23 = vsyncadd [#allocation3], %s22
      %s24 = sshll.u32 [#allocation2], 4
      %s25 = int_to_ptr.vmem [resolvable:$true] %s24
      %30 = dma.hbm_to_vmem [thread:$0]  %s0, 256, %s25, [#allocation3], 128, 128, 8
    $region5: #{tpu_custom_call.1} parent=1 // pred_fallthru
      _
    // Predicated region
    $region6: #{tpu_custom_call.1} parent=1 // pred_check
      _
    $region7: #{tpu_custom_call.1} parent=1 // pred_check_branch
      %32 = sbr.rel (0) target = $region9
    $region8: #{tpu_custom_call.1} parent=1 // pred_region
      %s34 = ssub.s32 256, 256
      %35 = vsyncadd [#allocation6], %s34
      %s36 = sshll.u32 [#allocation5], 4
      %s37 = int_to_ptr.vmem [resolvable:$true] %s36
      %42 = dma.hbm_to_vmem [thread:$0]  %s1, 256, %s37, [#allocation6], 64, 64, 4
    $region9: #{tpu_custom_call.1} parent=1 // pred_fallthru
      _
    // Predicated region
    $region10: #{tpu_custom_call.1} parent=1 // pred_check
      _
    $region11: #{tpu_custom_call.1} parent=1 // pred_check_branch
      %44 = sbr.rel (0) target = $region13
    $region12: #{tpu_custom_call.1} parent=1 // pred_region
      _
    $region13: #{tpu_custom_call.1} parent=1 // pred_fallthru
      _
    // Predicated region
    $region14: #{tpu_custom_call.1} parent=1 // pred_check
      _
    $region15: #{tpu_custom_call.1} parent=1 // pred_check_branch
      %46 = sbr.rel (0) target = $region17
    $region16: #{tpu_custom_call.1} parent=1 // pred_region
      %s48 = ssub.s32 512, 512
      %49 = vsyncadd [#allocation6], %s48
      %s50 = sshll.u32 [#allocation7], 4
      %s51 = int_to_ptr.vmem [resolvable:$true] %s50
      %56 = dma.hbm_to_vmem [thread:$0]  %s3, 512, %s51, [#allocation6], 64, 64, 4
    $region17: #{tpu_custom_call.1} parent=1 // pred_fallthru
      _
    // Predicated region
    $region18: #{tpu_custom_call.1} parent=1 // pred_check
      _
    $region19: #{tpu_custom_call.1} parent=1 // pred_check_branch
      %58 = sbr.rel (0) target = $region21
    $region20: #{tpu_custom_call.1} parent=1 // pred_region
      _
    $region21: #{tpu_custom_call.1} parent=1 // pred_fallthru
      _
    // Predicated region
    $region22: #{tpu_custom_call.1} parent=1 // pred_check
      _
    $region23: #{tpu_custom_call.1} parent=1 // pred_check_branch
      %60 = sbr.rel (0) target = $region25
    $region24: #{tpu_custom_call.1} parent=1 // pred_region
      %s62 = ssub.s32 3584, 3584
      %63 = vsyncadd [#allocation9], %s62
      %s64 = sshll.u32 [#allocation8], 4
      %s65 = int_to_ptr.vmem [resolvable:$true] %s64
      %70 = dma.hbm_to_vmem [thread:$0]  %s5, 3584, %s65, [#allocation9], 448, 448, 28
    $region25: #{tpu_custom_call.1} parent=1 // pred_fallthru
      _
    // Predicated region
    $region26: #{tpu_custom_call.1} parent=1 // pred_check
      _
    $region27: #{tpu_custom_call.1} parent=1 // pred_check_branch
      %72 = sbr.rel (0) target = $region29
    $region28: #{tpu_custom_call.1} parent=1 // pred_region
      _
    $region29: #{tpu_custom_call.1} parent=1 // pred_fallthru
      _
    // Predicated region
    $region30: #{tpu_custom_call.1} parent=1 // pred_check
      _
    $region31: #{tpu_custom_call.1} parent=1 // pred_check_branch
      %74 = sbr.rel (0) target = $region33
    $region32: #{tpu_custom_call.1} parent=1 // pred_region
      %75 = dma.done [#allocation3], 256
    $region33: #{tpu_custom_call.1} parent=1 // pred_fallthru
      _
    // Predicated region
    $region34: #{tpu_custom_call.1} parent=1 // pred_check
      _
    $region35: #{tpu_custom_call.1} parent=1 // pred_check_branch
      %77 = sbr.rel (0) target = $region37
    $region36: #{tpu_custom_call.1} parent=1 // pred_region
      %78 = dma.done [#allocation6], 256
    $region37: #{tpu_custom_call.1} parent=1 // pred_fallthru
      _
    // Predicated region
    $region38: #{tpu_custom_call.1} parent=1 // pred_check
      _
    $region39: #{tpu_custom_call.1} parent=1 // pred_check_branch
      %80 = sbr.rel (0) target = $region41
    $region40: #{tpu_custom_call.1} parent=1 // pred_region
      %81 = dma.done [#allocation6], 512
    $region41: #{tpu_custom_call.1} parent=1 // pred_fallthru
      _
    // Predicated region
    $region42: #{tpu_custom_call.1} parent=1 // pred_check
      _
    $region43: #{tpu_custom_call.1} parent=1 // pred_check_branch
      %83 = sbr.rel (0) target = $region45
    $region44: #{tpu_custom_call.1} parent=1 // pred_region
      %84 = dma.done [#allocation9], 3584
    $region45: #{tpu_custom_call.1} parent=1 // pred_fallthru
      _
    %v86 = vld [vmem:[#allocation2] sm:$0xff]
    %v87 = vld [vmem:[#allocation2 + $0x8] sm:$0xff]
    %v88 = vpack.c.bf16 %v87, %v86
    %v89 = vld [vmem:[#allocation5] sm:$0xf]
    %v90 = vld [vmem:[#allocation5 + $0x4] sm:$0xf]
    %v91 = vld [vmem:[#allocation5 + $0x8] sm:$0xf]
    %v92 = vld [vmem:[#allocation5 + $0xc] sm:$0xf]
    %v93 = vld [vmem:[%s2] sm:$0x1]
    %v95 = vlaneseq
    %v96 = vshrl.u32 %v95, 7
    %v97 = vsub.s32 0, %v96
    %v98 = vrot.slane %v93, %v97
    %v104 = vunpack.c.l.b16 %v89
    %v105 = vunpack.c.l.b16 %v90
    %v106 = vunpack.c.l.b16 %v91
    %v107 = vunpack.c.l.b16 %v92
    %v108 = vpack.c.b16 %v105, %v104
    %v109 = vpack.c.b16 %v107, %v106
    %vm112 = vcmask 261120
    %v114 = vsel %vm112, %v88, 0
    %116 = vmatprep.subr.bf16.mxu0 0
    %117 = vmatpush1.bf16.msra.mxu0 %v108
    %118 = vmatprep.subr.bf16.mxu0 0
    %119 = vmatpush1.bf16.msra.mxu0 %v109
    %120 = vmatprep.subr.bf16.mxu0 0
    %121 = vmatpush1.bf16.msra.mxu0 0
    %122 = vmatprep.subr.bf16.mxu0 0
    %123 = vmatpush1.bf16.msra.mxu0 0
    %124 = vmatprep.subr.bf16.mxu0 0
    %125 = vmatpush1.bf16.msra.mxu0 0
    %126 = vmatprep.subr.bf16.mxu0 0
    %127 = vmatpush1.bf16.msra.mxu0 0
    %128 = vmatprep.subr.bf16.mxu0 0
    %129 = vmatpush1.bf16.msra.mxu0 0
    %130 = vmatprep.subr.bf16.mxu0 0
    %131 = vmatpush1.bf16.msra.mxu0 0
    %132 = vmatprep.subr.bf16.mxu0 0
    %133 = vmatpush1.bf16.msra.mxu0 0
    %134 = vmatprep.subr.bf16.mxu0 0
    %135 = vmatpush1.bf16.msra.mxu0 0
    %136 = vmatprep.subr.bf16.mxu0 0
    %137 = vmatpush1.bf16.msra.mxu0 0
    %138 = vmatprep.subr.bf16.mxu0 0
    %139 = vmatpush1.bf16.msra.mxu0 0
    %140 = vmatprep.subr.bf16.mxu0 0
    %141 = vmatpush1.bf16.msra.mxu0 0
    %142 = vmatprep.subr.bf16.mxu0 0
    %143 = vmatpush1.bf16.msra.mxu0 0
    %144 = vmatprep.subr.bf16.mxu0 0
    %145 = vmatpush1.bf16.msra.mxu0 0
    %146 = vmatprep.subr.bf16.mxu0 0
    %147 = vmatpush1.bf16.msra.mxu0 0
    %148 = vmatprep.mubr.bf16.mxu0 0
    %149 = vmatmul.mubr.bf16.gmra.mrb[0].mxu0 %v114
    %v150 = vpop.f32.mrb[0].mxu0
    %v151 = vadd.f32 %v98, %v150
    %v152 = vpop.f32.mrb[0].mxu0
    %v153 = vpop.f32.mrb[0].mxu0
    %v154 = vadd.f32 %v98, %v153
    %v155 = vpop.f32.mrb[0].mxu0
    %156 = vdwg.mxu0
    %v157 = vmax.f32 %v151, 0.0
    %v158 = vmax.f32 %v154, 0.0
    %v159 = vpack.c.bf16 %v158, %v157
    %v160 = vld [vmem:[#allocation7] sm:$0xf]
    %v161 = vld [vmem:[#allocation7 + $0x4] sm:$0xf]
    %v162 = vld [vmem:[#allocation7 + $0x8] sm:$0xf]
    %v163 = vld [vmem:[#allocation7 + $0xc] sm:$0xf]
    %v164 = vld [vmem:[#allocation7 + $0x10] sm:$0xf]
    %v165 = vld [vmem:[#allocation7 + $0x14] sm:$0xf]
    %v166 = vld [vmem:[#allocation7 + $0x18] sm:$0xf]
    %v167 = vld [vmem:[#allocation7 + $0x1c] sm:$0xf]
    %v168 = vld [vmem:[%s4] sm:$0x1]
    %v170 = vlaneseq
    %v171 = vshrl.u32 %v170, 7
    %v172 = vsub.s32 0, %v171
    %v173 = vrot.slane %v168, %v172
    %v183 = vunpack.c.l.b16 %v160
    %v184 = vunpack.c.l.b16 %v161
    %v185 = vunpack.c.l.b16 %v162
    %v186 = vunpack.c.l.b16 %v163
    %v187 = vunpack.c.l.b16 %v164
    %v188 = vunpack.c.l.b16 %v165
    %v189 = vunpack.c.l.b16 %v166
    %v190 = vunpack.c.l.b16 %v167
    %v191 = vpack.c.b16 %v184, %v183
    %v192 = vpack.c.b16 %v186, %v185
    %v193 = vpack.c.b16 %v188, %v187
    %v194 = vpack.c.b16 %v190, %v189
    %vm199 = vcmask 523264
    %v201 = vsel %vm199, %v159, 0
    %203 = vmatprep.subr.bf16.mxu0 0
    %204 = vmatpush1.bf16.msra.mxu0 %v191
    %205 = vmatprep.subr.bf16.mxu0 0
    %206 = vmatpush1.bf16.msra.mxu0 %v192
    %207 = vmatprep.subr.bf16.mxu0 0
    %208 = vmatpush1.bf16.msra.mxu0 %v193
    %209 = vmatprep.subr.bf16.mxu0 0
    %210 = vmatpush1.bf16.msra.mxu0 %v194
    %211 = vmatprep.subr.bf16.mxu0 0
    %212 = vmatpush1.bf16.msra.mxu0 0
    %213 = vmatprep.subr.bf16.mxu0 0
    %214 = vmatpush1.bf16.msra.mxu0 0
    %215 = vmatprep.subr.bf16.mxu0 0
    %216 = vmatpush1.bf16.msra.mxu0 0
    %217 = vmatprep.subr.bf16.mxu0 0
    %218 = vmatpush1.bf16.msra.mxu0 0
    %219 = vmatprep.subr.bf16.mxu0 0
    %220 = vmatpush1.bf16.msra.mxu0 0
    %221 = vmatprep.subr.bf16.mxu0 0
    %222 = vmatpush1.bf16.msra.mxu0 0
    %223 = vmatprep.subr.bf16.mxu0 0
    %224 = vmatpush1.bf16.msra.mxu0 0
    %225 = vmatprep.subr.bf16.mxu0 0
    %226 = vmatpush1.bf16.msra.mxu0 0
    %227 = vmatprep.subr.bf16.mxu0 0
    %228 = vmatpush1.bf16.msra.mxu0 0
    %229 = vmatprep.subr.bf16.mxu0 0
    %230 = vmatpush1.bf16.msra.mxu0 0
    %231 = vmatprep.subr.bf16.mxu0 0
    %232 = vmatpush1.bf16.msra.mxu0 0
    %233 = vmatprep.subr.bf16.mxu0 0
    %234 = vmatpush1.bf16.msra.mxu0 0
    %235 = vmatprep.mubr.bf16.mxu0 0
    %236 = vmatmul.mubr.bf16.gmra.mrb[0].mxu0 %v201
    %v237 = vpop.f32.mrb[0].mxu0
    %v238 = vadd.f32 %v173, %v237
    %v239 = vpop.f32.mrb[0].mxu0
    %v240 = vpop.f32.mrb[0].mxu0
    %v241 = vadd.f32 %v173, %v240
    %v242 = vpop.f32.mrb[0].mxu0
    %243 = vdwg.mxu0
    %v244 = vmax.f32 %v238, 0.0
    %v245 = vmax.f32 %v241, 0.0
    %v246 = vpack.c.bf16 %v245, %v244
    %v247 = vld [vmem:[#allocation8] sm:$0xff]
    %v248 = vld [vmem:[#allocation8 + $0x8] sm:$0xff]
    %v249 = vld [vmem:[#allocation8 + $0x10] sm:$0xff]
    %v250 = vld [vmem:[#allocation8 + $0x18] sm:$0xf]
    %v251 = vld [vmem:[#allocation8 + $0x1c] sm:$0xff]
    %v252 = vld [vmem:[#allocation8 + $0x24] sm:$0xff]
    %v253 = vld [vmem:[#allocation8 + $0x2c] sm:$0xff]
    %v254 = vld [vmem:[#allocation8 + $0x34] sm:$0xf]
    %v255 = vld [vmem:[#allocation8 + $0x38] sm:$0xff]
    %v256 = vld [vmem:[#allocation8 + $0x40] sm:$0xff]
    %v257 = vld [vmem:[#allocation8 + $0x48] sm:$0xff]
    %v258 = vld [vmem:[#allocation8 + $0x50] sm:$0xf]
    %v259 = vld [vmem:[#allocation8 + $0x54] sm:$0xff]
    %v260 = vld [vmem:[#allocation8 + $0x5c] sm:$0xff]
    %v261 = vld [vmem:[#allocation8 + $0x64] sm:$0xff]
    %v262 = vld [vmem:[#allocation8 + $0x6c] sm:$0xf]
    %v263 = vld [vmem:[#allocation8 + $0x70] sm:$0xff]
    %v264 = vld [vmem:[#allocation8 + $0x78] sm:$0xff]
    %v265 = vld [vmem:[#allocation8 + $0x80] sm:$0xff]
    %v266 = vld [vmem:[#allocation8 + $0x88] sm:$0xf]
    %v267 = vld [vmem:[#allocation8 + $0x8c] sm:$0xff]
    %v268 = vld [vmem:[#allocation8 + $0x94] sm:$0xff]
    %v269 = vld [vmem:[#allocation8 + $0x9c] sm:$0xff]
    %v270 = vld [vmem:[#allocation8 + $0xa4] sm:$0xf]
    %v271 = vld [vmem:[#allocation8 + $0xa8] sm:$0xff]
    %v272 = vld [vmem:[#allocation8 + $0xb0] sm:$0xff]
    %v273 = vld [vmem:[#allocation8 + $0xb8] sm:$0xff]
    %v274 = vld [vmem:[#allocation8 + $0xc0] sm:$0xf]
    %v275 = vld [vmem:[#allocation8 + $0xc4] sm:$0xff]
    %v276 = vld [vmem:[#allocation8 + $0xcc] sm:$0xff]
    %v277 = vld [vmem:[#allocation8 + $0xd4] sm:$0xff]
    %v278 = vld [vmem:[#allocation8 + $0xdc] sm:$0xf]
    %v279 = vld [vmem:[%s6] sm:$0x7f]
    %v281 = vlaneseq
    %v282 = vshrl.u32 %v281, 7
    %v283 = vsub.s32 0, %v282
    %v284 = vrot.slane %v279, %v283
    %v285 = vlaneseq
    %v286 = vshrl.u32 %v285, 7
    %v287 = vsub.s32 1, %v286
    %v288 = vrot.slane %v279, %v287
    %v289 = vlaneseq
    %v290 = vshrl.u32 %v289, 7
    %v291 = vsub.s32 2, %v290
    %v292 = vrot.slane %v279, %v291
    %v293 = vlaneseq
    %v294 = vshrl.u32 %v293, 7
    %v295 = vsub.s32 3, %v294
    %v296 = vrot.slane %v279, %v295
    %v297 = vlaneseq
    %v298 = vshrl.u32 %v297, 7
    %v299 = vsub.s32 4, %v298
    %v300 = vrot.slane %v279, %v299
    %v301 = vlaneseq
    %v302 = vshrl.u32 %v301, 7
    %v303 = vsub.s32 5, %v302
    %v304 = vrot.slane %v279, %v303
    %v305 = vlaneseq
    %v306 = vshrl.u32 %v305, 7
    %v307 = vsub.s32 6, %v306
    %v308 = vrot.slane %v279, %v307
    %v348 = vunpack.c.l.b16 %v247
    %v349 = vunpack.c.h.b16 %v247
    %v350 = vunpack.c.l.b16 %v248
    %v351 = vunpack.c.h.b16 %v248
    %v352 = vunpack.c.l.b16 %v249
    %v353 = vunpack.c.h.b16 %v249
    %v354 = vunpack.c.l.b16 %v250
    %v355 = vunpack.c.l.b16 %v251
    %v356 = vunpack.c.h.b16 %v251
    %v357 = vunpack.c.l.b16 %v252
    %v358 = vunpack.c.h.b16 %v252
    %v359 = vunpack.c.l.b16 %v253
    %v360 = vunpack.c.h.b16 %v253
    %v361 = vunpack.c.l.b16 %v254
    %v362 = vunpack.c.l.b16 %v255
    %v363 = vunpack.c.h.b16 %v255
    %v364 = vunpack.c.l.b16 %v256
    %v365 = vunpack.c.h.b16 %v256
    %v366 = vunpack.c.l.b16 %v257
    %v367 = vunpack.c.h.b16 %v257
    %v368 = vunpack.c.l.b16 %v258
    %v369 = vunpack.c.l.b16 %v259
    %v370 = vunpack.c.h.b16 %v259
    %v371 = vunpack.c.l.b16 %v260
    %v372 = vunpack.c.h.b16 %v260
    %v373 = vunpack.c.l.b16 %v261
    %v374 = vunpack.c.h.b16 %v261
    %v375 = vunpack.c.l.b16 %v262
    %v376 = vunpack.c.l.b16 %v263
    %v377 = vunpack.c.h.b16 %v263
    %v378 = vunpack.c.l.b16 %v264
    %v379 = vunpack.c.h.b16 %v264
    %v380 = vunpack.c.l.b16 %v265
    %v381 = vunpack.c.h.b16 %v265
    %v382 = vunpack.c.l.b16 %v266
    %v383 = vunpack.c.l.b16 %v267
    %v384 = vunpack.c.h.b16 %v267
    %v385 = vunpack.c.l.b16 %v268
    %v386 = vunpack.c.h.b16 %v268
    %v387 = vunpack.c.l.b16 %v269
    %v388 = vunpack.c.h.b16 %v269
    %v389 = vunpack.c.l.b16 %v270
    %v390 = vunpack.c.l.b16 %v271
    %v391 = vunpack.c.h.b16 %v271
    %v392 = vunpack.c.l.b16 %v272
    %v393 = vunpack.c.h.b16 %v272
    %v394 = vunpack.c.l.b16 %v273
    %v395 = vunpack.c.h.b16 %v273
    %v396 = vunpack.c.l.b16 %v274
    %v397 = vunpack.c.l.b16 %v275
    %v398 = vunpack.c.h.b16 %v275
    %v399 = vunpack.c.l.b16 %v276
    %v400 = vunpack.c.h.b16 %v276
    %v401 = vunpack.c.l.b16 %v277
    %v402 = vunpack.c.h.b16 %v277
    %v403 = vunpack.c.l.b16 %v278
    %v404 = vpack.c.b16 %v355, %v348
    %v405 = vpack.c.b16 %v356, %v349
    %v406 = vpack.c.b16 %v357, %v350
    %v407 = vpack.c.b16 %v358, %v351
    %v408 = vpack.c.b16 %v359, %v352
    %v409 = vpack.c.b16 %v360, %v353
    %v410 = vpack.c.b16 %v361, %v354
    %v411 = vpack.c.b16 %v369, %v362
    %v412 = vpack.c.b16 %v370, %v363
    %v413 = vpack.c.b16 %v371, %v364
    %v414 = vpack.c.b16 %v372, %v365
    %v415 = vpack.c.b16 %v373, %v366
    %v416 = vpack.c.b16 %v374, %v367
    %v417 = vpack.c.b16 %v375, %v368
    %v418 = vpack.c.b16 %v383, %v376
    %v419 = vpack.c.b16 %v384, %v377
    %v420 = vpack.c.b16 %v385, %v378
    %v421 = vpack.c.b16 %v386, %v379
    %v422 = vpack.c.b16 %v387, %v380
    %v423 = vpack.c.b16 %v388, %v381
    %v424 = vpack.c.b16 %v389, %v382
    %v425 = vpack.c.b16 %v397, %v390
    %v426 = vpack.c.b16 %v398, %v391
    %v427 = vpack.c.b16 %v399, %v392
    %v428 = vpack.c.b16 %v400, %v393
    %v429 = vpack.c.b16 %v401, %v394
    %v430 = vpack.c.b16 %v402, %v395
    %v431 = vpack.c.b16 %v403, %v396
    %v461 = vsel %vm199, %v246, 0
    %463 = vmatprep.subr.bf16.mxu0 %v405
    %464 = vmatpush1.bf16.msra.mxu0 %v404
    %465 = vmatprep.subr.bf16.mxu0 %v412
    %466 = vmatpush1.bf16.msra.mxu0 %v411
    %467 = vmatprep.subr.bf16.mxu0 %v419
    %468 = vmatpush1.bf16.msra.mxu0 %v418
    %469 = vmatprep.subr.bf16.mxu0 %v426
    %470 = vmatpush1.bf16.msra.mxu0 %v425
    %471 = vmatprep.subr.bf16.mxu0 0
    %472 = vmatpush1.bf16.msra.mxu0 0
    %473 = vmatprep.subr.bf16.mxu0 0
    %474 = vmatpush1.bf16.msra.mxu0 0
    %475 = vmatprep.subr.bf16.mxu0 0
    %476 = vmatpush1.bf16.msra.mxu0 0
    %477 = vmatprep.subr.bf16.mxu0 0
    %478 = vmatpush1.bf16.msra.mxu0 0
    %479 = vmatprep.subr.bf16.mxu0 0
    %480 = vmatpush1.bf16.msra.mxu0 0
    %481 = vmatprep.subr.bf16.mxu0 0
    %482 = vmatpush1.bf16.msra.mxu0 0
    %483 = vmatprep.subr.bf16.mxu0 0
    %484 = vmatpush1.bf16.msra.mxu0 0
    %485 = vmatprep.subr.bf16.mxu0 0
    %486 = vmatpush1.bf16.msra.mxu0 0
    %487 = vmatprep.subr.bf16.mxu0 0
    %488 = vmatpush1.bf16.msra.mxu0 0
    %489 = vmatprep.subr.bf16.mxu0 0
    %490 = vmatpush1.bf16.msra.mxu0 0
    %491 = vmatprep.subr.bf16.mxu0 0
    %492 = vmatpush1.bf16.msra.mxu0 0
    %493 = vmatprep.subr.bf16.mxu0 0
    %494 = vmatpush1.bf16.msra.mxu0 0
    %495 = vmatprep.mubr.bf16.mxu0 0
    %496 = vmatmul.mubr.bf16.gmra.mrb[0].mxu0 %v461
    %v497 = vpop.f32.mrb[0].mxu0
    %v498 = vadd.f32 %v284, %v497
    %v499 = vpop.f32.mrb[0].mxu0
    %v500 = vadd.f32 %v288, %v499
    %v501 = vpop.f32.mrb[0].mxu0
    %v502 = vadd.f32 %v284, %v501
    %v503 = vpop.f32.mrb[0].mxu0
    %v504 = vadd.f32 %v288, %v503
    %505 = vdwg.mxu0
    %506 = vmatprep.subr.bf16.mxu0 %v407
    %507 = vmatpush1.bf16.msra.mxu0 %v406
    %508 = vmatprep.subr.bf16.mxu0 %v414
    %509 = vmatpush1.bf16.msra.mxu0 %v413
    %510 = vmatprep.subr.bf16.mxu0 %v421
    %511 = vmatpush1.bf16.msra.mxu0 %v420
    %512 = vmatprep.subr.bf16.mxu0 %v428
    %513 = vmatpush1.bf16.msra.mxu0 %v427
    %514 = vmatprep.subr.bf16.mxu0 0
    %515 = vmatpush1.bf16.msra.mxu0 0
    %516 = vmatprep.subr.bf16.mxu0 0
    %517 = vmatpush1.bf16.msra.mxu0 0
    %518 = vmatprep.subr.bf16.mxu0 0
    %519 = vmatpush1.bf16.msra.mxu0 0
    %520 = vmatprep.subr.bf16.mxu0 0
    %521 = vmatpush1.bf16.msra.mxu0 0
    %522 = vmatprep.subr.bf16.mxu0 0
    %523 = vmatpush1.bf16.msra.mxu0 0
    %524 = vmatprep.subr.bf16.mxu0 0
    %525 = vmatpush1.bf16.msra.mxu0 0
    %526 = vmatprep.subr.bf16.mxu0 0
    %527 = vmatpush1.bf16.msra.mxu0 0
    %528 = vmatprep.subr.bf16.mxu0 0
    %529 = vmatpush1.bf16.msra.mxu0 0
    %530 = vmatprep.subr.bf16.mxu0 0
    %531 = vmatpush1.bf16.msra.mxu0 0
    %532 = vmatprep.subr.bf16.mxu0 0
    %533 = vmatpush1.bf16.msra.mxu0 0
    %534 = vmatprep.subr.bf16.mxu0 0
    %535 = vmatpush1.bf16.msra.mxu0 0
    %536 = vmatprep.subr.bf16.mxu0 0
    %537 = vmatpush1.bf16.msra.mxu0 0
    %538 = vmatprep.mubr.bf16.mxu0 0
    %539 = vmatmul.mubr.bf16.gmra.mrb[0].mxu0 %v461
    %v540 = vpop.f32.mrb[0].mxu0
    %v541 = vadd.f32 %v292, %v540
    %v542 = vpop.f32.mrb[0].mxu0
    %v543 = vadd.f32 %v296, %v542
    %v544 = vpop.f32.mrb[0].mxu0
    %v545 = vadd.f32 %v292, %v544
    %v546 = vpop.f32.mrb[0].mxu0
    %v547 = vadd.f32 %v296, %v546
    %548 = vdwg.mxu0
    %549 = vmatprep.subr.bf16.mxu0 %v409
    %550 = vmatpush1.bf16.msra.mxu0 %v408
    %551 = vmatprep.subr.bf16.mxu0 %v416
    %552 = vmatpush1.bf16.msra.mxu0 %v415
    %553 = vmatprep.subr.bf16.mxu0 %v423
    %554 = vmatpush1.bf16.msra.mxu0 %v422
    %555 = vmatprep.subr.bf16.mxu0 %v430
    %556 = vmatpush1.bf16.msra.mxu0 %v429
    %557 = vmatprep.subr.bf16.mxu0 0
    %558 = vmatpush1.bf16.msra.mxu0 0
    %559 = vmatprep.subr.bf16.mxu0 0
    %560 = vmatpush1.bf16.msra.mxu0 0
    %561 = vmatprep.subr.bf16.mxu0 0
    %562 = vmatpush1.bf16.msra.mxu0 0
    %563 = vmatprep.subr.bf16.mxu0 0
    %564 = vmatpush1.bf16.msra.mxu0 0
    %565 = vmatprep.subr.bf16.mxu0 0
    %566 = vmatpush1.bf16.msra.mxu0 0
    %567 = vmatprep.subr.bf16.mxu0 0
    %568 = vmatpush1.bf16.msra.mxu0 0
    %569 = vmatprep.subr.bf16.mxu0 0
    %570 = vmatpush1.bf16.msra.mxu0 0
    %571 = vmatprep.subr.bf16.mxu0 0
    %572 = vmatpush1.bf16.msra.mxu0 0
    %573 = vmatprep.subr.bf16.mxu0 0
    %574 = vmatpush1.bf16.msra.mxu0 0
    %575 = vmatprep.subr.bf16.mxu0 0
    %576 = vmatpush1.bf16.msra.mxu0 0
    %577 = vmatprep.subr.bf16.mxu0 0
    %578 = vmatpush1.bf16.msra.mxu0 0
    %579 = vmatprep.subr.bf16.mxu0 0
    %580 = vmatpush1.bf16.msra.mxu0 0
    %581 = vmatprep.mubr.bf16.mxu0 0
    %582 = vmatmul.mubr.bf16.gmra.mrb[0].mxu0 %v461
    %v583 = vpop.f32.mrb[0].mxu0
    %v584 = vadd.f32 %v300, %v583
    %v585 = vpop.f32.mrb[0].mxu0
    %v586 = vadd.f32 %v304, %v585
    %v587 = vpop.f32.mrb[0].mxu0
    %v588 = vadd.f32 %v300, %v587
    %v589 = vpop.f32.mrb[0].mxu0
    %v590 = vadd.f32 %v304, %v589
    %591 = vdwg.mxu0
    %592 = vmatprep.subr.bf16.mxu0 0
    %593 = vmatpush1.bf16.msra.mxu0 %v410
    %594 = vmatprep.subr.bf16.mxu0 0
    %595 = vmatpush1.bf16.msra.mxu0 %v417
    %596 = vmatprep.subr.bf16.mxu0 0
    %597 = vmatpush1.bf16.msra.mxu0 %v424
    %598 = vmatprep.subr.bf16.mxu0 0
    %599 = vmatpush1.bf16.msra.mxu0 %v431
    %600 = vmatprep.subr.bf16.mxu0 0
    %601 = vmatpush1.bf16.msra.mxu0 0
    %602 = vmatprep.subr.bf16.mxu0 0
    %603 = vmatpush1.bf16.msra.mxu0 0
    %604 = vmatprep.subr.bf16.mxu0 0
    %605 = vmatpush1.bf16.msra.mxu0 0
    %606 = vmatprep.subr.bf16.mxu0 0
    %607 = vmatpush1.bf16.msra.mxu0 0
    %608 = vmatprep.subr.bf16.mxu0 0
    %609 = vmatpush1.bf16.msra.mxu0 0
    %610 = vmatprep.subr.bf16.mxu0 0
    %611 = vmatpush1.bf16.msra.mxu0 0
    %612 = vmatprep.subr.bf16.mxu0 0
    %613 = vmatpush1.bf16.msra.mxu0 0
    %614 = vmatprep.subr.bf16.mxu0 0
    %615 = vmatpush1.bf16.msra.mxu0 0
    %616 = vmatprep.subr.bf16.mxu0 0
    %617 = vmatpush1.bf16.msra.mxu0 0
    %618 = vmatprep.subr.bf16.mxu0 0
    %619 = vmatpush1.bf16.msra.mxu0 0
    %620 = vmatprep.subr.bf16.mxu0 0
    %621 = vmatpush1.bf16.msra.mxu0 0
    %622 = vmatprep.subr.bf16.mxu0 0
    %623 = vmatpush1.bf16.msra.mxu0 0
    %624 = vmatprep.mubr.bf16.mxu0 0
    %625 = vmatmul.mubr.bf16.gmra.mrb[0].mxu0 %v461
    %v626 = vpop.f32.mrb[0].mxu0
    %v627 = vadd.f32 %v308, %v626
    %v628 = vpop.f32.mrb[0].mxu0
    %v629 = vpop.f32.mrb[0].mxu0
    %v630 = vadd.f32 %v308, %v629
    %v631 = vpop.f32.mrb[0].mxu0
    %632 = vdwg.mxu0
    %633 = vst [vmem:[#allocation10] sm:$0xff] %v498
    %634 = vst [vmem:[#allocation10 + $0x8] sm:$0xff] %v500
    %635 = vst [vmem:[#allocation10 + $0x10] sm:$0xff] %v541
    %636 = vst [vmem:[#allocation10 + $0x18] sm:$0xff] %v543
    %637 = vst [vmem:[#allocation10 + $0x20] sm:$0xff] %v584
    %638 = vst [vmem:[#allocation10 + $0x28] sm:$0xff] %v586
    %vm639 = vcmask 130048
    %640 = vst.msk [vmem:[#allocation10 + $0x30] sm:$0xff] %vm639, %v627
    %641 = vst [vmem:[#allocation10 + $0x38] sm:$0xff] %v502
    %642 = vst [vmem:[#allocation10 + $0x40] sm:$0xff] %v504
    %643 = vst [vmem:[#allocation10 + $0x48] sm:$0xff] %v545
    %644 = vst [vmem:[#allocation10 + $0x50] sm:$0xff] %v547
    %645 = vst [vmem:[#allocation10 + $0x58] sm:$0xff] %v588
    %646 = vst [vmem:[#allocation10 + $0x60] sm:$0xff] %v590
    %647 = vst.msk [vmem:[#allocation10 + $0x68] sm:$0xff] %vm639, %v630
    %v648 = vsub.f32 0.0, %v498
    %v649 = vsub.f32 0.0, %v500
    %v650 = vsub.f32 0.0, %v541
    %v651 = vsub.f32 0.0, %v543
    %v652 = vsub.f32 0.0, %v584
    %v653 = vsub.f32 0.0, %v586
    %v654 = vsub.f32 0.0, %v627
    %v655 = vsub.f32 0.0, %v502
    %v656 = vsub.f32 0.0, %v504
    %v657 = vsub.f32 0.0, %v545
    %v658 = vsub.f32 0.0, %v547
    %v659 = vsub.f32 0.0, %v588
    %v660 = vsub.f32 0.0, %v590
    %v661 = vsub.f32 0.0, %v630
    %v662 = vmul.f32 %v648, 1.442695
    %v663 = vpow.pop %v662
    %v664 = vmul.f32 %v649, 1.442695
    %v665 = vpow.pop %v664
    %v666 = vmul.f32 %v650, 1.442695
    %v667 = vpow.pop %v666
    %v668 = vmul.f32 %v651, 1.442695
    %v669 = vpow.pop %v668
    %v670 = vmul.f32 %v652, 1.442695
    %v671 = vpow.pop %v670
    %v672 = vmul.f32 %v653, 1.442695
    %v673 = vpow.pop %v672
    %v674 = vmul.f32 %v654, 1.442695
    %v675 = vpow.pop %v674
    %v676 = vmul.f32 %v655, 1.442695
    %v677 = vpow.pop %v676
    %v678 = vmul.f32 %v656, 1.442695
    %v679 = vpow.pop %v678
    %v680 = vmul.f32 %v657, 1.442695
    %v681 = vpow.pop %v680
    %v682 = vmul.f32 %v658, 1.442695
    %v683 = vpow.pop %v682
    %v684 = vmul.f32 %v659, 1.442695
    %v685 = vpow.pop %v684
    %v686 = vmul.f32 %v660, 1.442695
    %v687 = vpow.pop %v686
    %v688 = vmul.f32 %v661, 1.442695
    %v689 = vpow.pop %v688
    %v690 = vadd.f32 %v663, 1.0
    %v691 = vadd.f32 %v665, 1.0
    %v692 = vadd.f32 %v667, 1.0
    %v693 = vadd.f32 %v669, 1.0
    %v694 = vadd.f32 %v671, 1.0
    %v695 = vadd.f32 %v673, 1.0
    %v696 = vadd.f32 %v675, 1.0
    %v697 = vadd.f32 %v677, 1.0
    %v698 = vadd.f32 %v679, 1.0
    %v699 = vadd.f32 %v681, 1.0
    %v700 = vadd.f32 %v683, 1.0
    %v701 = vadd.f32 %v685, 1.0
    %v702 = vadd.f32 %v687, 1.0
    %v703 = vadd.f32 %v689, 1.0
    %v704 = vrcp.pop %v690
    %v705 = vrcp.pop %v691
    %v706 = vrcp.pop %v692
    %v707 = vrcp.pop %v693
    %v708 = vrcp.pop %v694
    %v709 = vrcp.pop %v695
    %v710 = vrcp.pop %v696
    %v711 = vrcp.pop %v697
    %v712 = vrcp.pop %v698
    %v713 = vrcp.pop %v699
    %v714 = vrcp.pop %v700
    %v715 = vrcp.pop %v701
    %v716 = vrcp.pop %v702
    %v717 = vrcp.pop %v703
    %v718 = vpack.c.bf16 %v711, %v704
    %v719 = vpack.c.bf16 %v712, %v705
    %v720 = vpack.c.bf16 %v713, %v706
    %v721 = vpack.c.bf16 %v714, %v707
    %v722 = vpack.c.bf16 %v715, %v708
    %v723 = vpack.c.bf16 %v716, %v709
    %v724 = vpack.c.bf16 %v717, %v710
    %v732 = vunpack.c.l.b16 %v718
    %v733 = vunpack.c.l.b16 %v719
    %v734 = vunpack.c.l.b16 %v720
    %v735 = vunpack.c.l.b16 %v721
    %v736 = vunpack.c.l.b16 %v722
    %v737 = vunpack.c.l.b16 %v723
    %v738 = vunpack.c.l.b16 %v724
    %v739 = vunpack.c.h.b16 %v718
    %v740 = vunpack.c.h.b16 %v719
    %v741 = vunpack.c.h.b16 %v720
    %v742 = vunpack.c.h.b16 %v721
    %v743 = vunpack.c.h.b16 %v722
    %v744 = vunpack.c.h.b16 %v723
    %v745 = vunpack.c.h.b16 %v724
    %v746 = vpack.c.b16 %v733, %v732
    %v747 = vpack.c.b16 %v735, %v734
    %v748 = vpack.c.b16 %v737, %v736
    %v749 = vpack.c.b16 %v738, %v738
    %v750 = vpack.c.b16 %v740, %v739
    %v751 = vpack.c.b16 %v742, %v741
    %v752 = vpack.c.b16 %v744, %v743
    %v753 = vpack.c.b16 %v745, %v745
    %762 = vst [vmem:[#allocation11] sm:$0xff] %v746
    %763 = vst [vmem:[#allocation11 + $0x8] sm:$0xff] %v747
    %764 = vst [vmem:[#allocation11 + $0x10] sm:$0xff] %v748
    %vm765 = vcmask 125952
    %766 = vst.msk [vmem:[#allocation11 + $0x18] sm:$0xf] %vm765, %v749
    %767 = vst [vmem:[#allocation11 + $0x1c] sm:$0xff] %v750
    %768 = vst [vmem:[#allocation11 + $0x24] sm:$0xff] %v751
    %769 = vst [vmem:[#allocation11 + $0x2c] sm:$0xff] %v752
    %770 = vst.msk [vmem:[#allocation11 + $0x34] sm:$0xf] %vm765, %v753
    // Predicated region
    $region46: #{tpu_custom_call.1} parent=1 // pred_check
      _
    $region47: #{tpu_custom_call.1} parent=1 // pred_check_branch
      %772 = sbr.rel (0) target = $region49
    $region48: #{tpu_custom_call.1} parent=1 // pred_region
      %s774 = ssub.s32 1792, 1792
      %775 = vsyncadd [#allocation4], %s774
      %s776 = sshll.u32 [#allocation10], 4
      %s777 = int_to_ptr.vmem [resolvable:$true] %s776
      %782 = dma.vmem_to_hbm [thread:$0]  %s777, 1792, %s7, [#allocation4], 896, 896, 56
    $region49: #{tpu_custom_call.1} parent=1 // pred_fallthru
      _
    // Predicated region
    $region50: #{tpu_custom_call.1} parent=1 // pred_check
      _
    $region51: #{tpu_custom_call.1} parent=1 // pred_check_branch
      %784 = sbr.rel (0) target = $region53
    $region52: #{tpu_custom_call.1} parent=1 // pred_region
      %s786 = ssub.s32 896, 896
      %787 = vsyncadd [#allocation12], %s786
      %s788 = sshll.u32 [#allocation11], 4
      %s789 = int_to_ptr.vmem [resolvable:$true] %s788
      %794 = dma.vmem_to_hbm [thread:$0]  %s789, 896, %s8, [#allocation12], 448, 448, 28
    $region53: #{tpu_custom_call.1} parent=1 // pred_fallthru
      _
    // Predicated region
    $region54: #{tpu_custom_call.1} parent=1 // pred_check
      _
    $region55: #{tpu_custom_call.1} parent=1 // pred_check_branch
      %796 = sbr.rel (0) target = $region57
    $region56: #{tpu_custom_call.1} parent=1 // pred_region
      %797 = dma.done [#allocation4], 1792
    $region57: #{tpu_custom_call.1} parent=1 // pred_fallthru
      _
    // Predicated region
    $region58: #{tpu_custom_call.1} parent=1 // pred_check
      _
    $region59: #{tpu_custom_call.1} parent=1 // pred_check_branch
      %799 = sbr.rel (0) target = $region61
    $region60: #{tpu_custom_call.1} parent=1 // pred_region
      %800 = dma.done [#allocation12], 896
    $region61: #{tpu_custom_call.1} parent=1 // pred_fallthru
      _
    %801 = vsyncpa [#allocation3], 1
    %802 = vsyncpa [#allocation6], 1
    %803 = vsyncpa [#allocation9], 1
    %804 = vsyncpa [#allocation4], 1
    %805 = vsyncpa [#allocation12], 1

</llo_original>
